<compile_context>
chip_gen: v5e
topology: v5e:2x2
jax: 0.10.0
libtpu: 0.0.40
codegen_flags: <defaults>
</compile_context>

<pallas_src>
import jax
import jax.numpy as jnp
import numpy as np
from jax.experimental import pallas as pl
from jax.experimental.pallas import tpu as pltpu


H1 = 128    # enc1 / dec1 hidden width
HZ = 64     # latent width
LANE = 128  # TPU lane width

# Per-generation sizing: batch-tile cap, #TensorCores to split over, VMEM
# budget used for tile sizing, and a safe ceiling for vmem_limit_bytes.
_GEN_CFG = {
    "v5e":     dict(tile_cap=256, cores=1, budget=64 << 20,  phys=120 << 20),
    "v6e":     dict(tile_cap=512, cores=1, budget=100 << 20, phys=120 << 20),
    "v7x":     dict(tile_cap=512, cores=2, budget=44 << 20,  phys=56 << 20),
    "unknown": dict(tile_cap=256, cores=1, budget=28 << 20,  phys=56 << 20),
}


def _round_up(x, m):
    return ((x + m - 1) // m) * m


def _tpu_generation():
    try:
        kind = jax.devices()[0].device_kind.lower()
    except Exception:
        return "unknown"
    if "v7" in kind or "7x" in kind:
        return "v7x"
    if "v6" in kind:
        return "v6e"
    if "v5 lite" in kind or "v5lite" in kind or "v5e" in kind:
        return "v5e"
    return "unknown"


def _vmem_estimate(tile_b, d_pad, act_bytes, w_bytes):
    """Rough VMEM bytes: streamed tiles x2 (double buffer) + resident weights x2."""
    per_step = tile_b * (d_pad * act_bytes        # x tile
                         + LANE * 4               # noise tile
                         + LANE * 4               # h out (lane padded)
                         + LANE * 4               # kl row-sum out (lane padded)
                         + d_pad * act_bytes)     # z tile
    weights = (d_pad * H1 + H1 * H1 + H1 * H1 + H1 * d_pad) * w_bytes
    biases = 8 * (H1 + 2 * HZ + H1 + d_pad) * 4   # (1,N) padded to (8,N) sublanes
    return 2 * per_step + 2 * (weights + biases) + (1 << 20)


def _pick_tile_b(batch, d_pad, act_bytes, w_bytes, cfg):
    t = min(_round_up(max(batch, 1), 8), cfg["tile_cap"])
    if cfg["cores"] > 1:
        # ensure >= cfg["cores"] grid steps so the parallel axis can be sharded
        t = min(t, max(8, _round_up(-(-batch // cfg["cores"]), 8)))
    while t > 8 and _vmem_estimate(t, d_pad, act_bytes, w_bytes) > cfg["budget"]:
        t = max(8, _round_up(t // 2, 8))
    return t


def _vae_kernel(x_ref, noise_ref,
                w1_ref, b1_ref,
                wml_ref, bml_ref,
                wd1_ref, bd1_ref,
                wd2_ref, bd2_ref,
                h_ref, z_ref, kl_ref):
    """Fused VAE forward for one batch tile.

    Outputs:
      h_ref  : (tile_b, 64)    reparameterized latent h
      z_ref  : (tile_b, D_pad) sigmoid decoder output (padded lanes hold 0.5)
      kl_ref : (tile_b, 1)     per-row KL sum (reduced to a scalar outside)
    """
    wdt = w1_ref.dtype  # matmul operand dtype (f32 or bf16); accumulation is f32

    # ---- encoder layer 1 ----
    x = x_ref[...]                                                    # (TB, Dp)
    a1 = jnp.dot(x.astype(wdt), w1_ref[...],
                 preferred_element_type=jnp.float32) + b1_ref[...]
    a1 = jnp.maximum(a1, 0.0)                                         # relu(enc1)

    # ---- fused mu | log-sigma projection: one full 128-lane MXU push ----
    ml = jnp.dot(a1.astype(wdt), wml_ref[...],
                 preferred_element_type=jnp.float32) + bml_ref[...]   # [mu | logsig]

    # Full-lane latent math: roll + lane select instead of 64-lane slices/concat.
    swapped = pltpu.roll(ml, shift=HZ, axis=1)                        # [logsig | mu]
    lane = jax.lax.broadcasted_iota(jnp.int32, ml.shape, 1)
    is_h = lane < HZ
    mu_b = jnp.where(is_h, ml, swapped)       # mu replicated to both lane halves
    ls_b = jnp.where(is_h, swapped, ml)       # logsig replicated to both halves
    sigma = jnp.exp(ls_b)                     # EUP, full 128 lanes

    noise = noise_ref[...]                    # (TB, 128) f32; upper lanes unused
    h_full = mu_b + sigma * noise             # lanes [0:64] = h (reparameterized)
    kl_full = sigma * sigma + mu_b * mu_b - ls_b - 0.5
    hkl = jnp.where(is_h, h_full, kl_full)    # [h | kl_elem] (decoder operand)

    h_ref[...] = h_full[:, :HZ].astype(h_ref.dtype)
    kl_ref[...] = jnp.sum(jnp.where(is_h, 0.0, kl_full),
                          axis=1, keepdims=True).astype(kl_ref.dtype)

    # ---- decoder ----
    # dec1 weight rows [64:128] are zero, so the kl lanes contribute exactly 0;
    # this keeps a full-K (128) MXU push with no slicing of the latent slab.
    d1 = jnp.dot(hkl.astype(wdt), wd1_ref[...],
                 preferred_element_type=jnp.float32) + bd1_ref[...]
    d1 = jnp.maximum(d1, 0.0)                                         # relu(dec1)
    logits = jnp.dot(d1.astype(wdt), wd2_ref[...],
                     preferred_element_type=jnp.float32) + bd2_ref[...]
    z_ref[...] = jax.nn.sigmoid(logits).astype(z_ref.dtype)


def prepare_params(raw_params, dim, *, weights_dtype=jnp.float32):
    """One-time weight preparation (pad / fuse / cast). Call once, reuse."""
    (w1, b1, wmu, bmu, wsg, bsg, wd1, bd1, wd2, bd2) = raw_params
    d_pad = _round_up(max(dim, 1), LANE)

    wml = jnp.concatenate([wmu, wsg], axis=1)            # (128, 128) mu|logsig
    bml = jnp.concatenate([bmu, bsg], axis=1)            # (1, 128)
    w1p = jnp.pad(w1, ((0, d_pad - dim), (0, 0)))        # (d_pad, 128)
    wd1p = jnp.pad(wd1, ((0, H1 - HZ), (0, 0)))          # (128, 128), rows 64: zero
    wd2p = jnp.pad(wd2, ((0, 0), (0, d_pad - dim)))      # (128, d_pad)
    bd2p = jnp.pad(bd2, ((0, 0), (0, d_pad - dim)))      # (1, d_pad)

    cast = lambda w: w.astype(weights_dtype)
    return dict(
        w1=cast(w1p), b1=b1.astype(jnp.float32),
        wml=cast(wml), bml=bml.astype(jnp.float32),
        wd1=cast(wd1p), bd1=bd1.astype(jnp.float32),
        wd2=cast(wd2p), bd2=bd2p.astype(jnp.float32),
        dim=dim, d_pad=d_pad, weights_dtype=np.dtype(weights_dtype),
    )


def memory_vae_forward(x, noise, prep, *, tile_b=None,
                       activations_dtype=jnp.float32):
    """x: (B, D), noise: (B, 64) standard-normal.  Returns (h, z, kl).

    `prep` comes from prepare_params (weights already padded/fused/cast).
    activations_dtype=jnp.bfloat16 halves the x / z HBM streams (recommended on
    v6e / v7x); accumulation and the exp / sigmoid / KL math remain f32.
    """
    B, D = x.shape
    assert D == prep["dim"], "input dim does not match prepared params"
    D_pad = prep["d_pad"]
    act_dt = np.dtype(activations_dtype)
    w_bytes = prep["weights_dtype"].itemsize

    gen = _tpu_generation()
    cfg = _GEN_CFG[gen]
    if tile_b is None:
        tile_b = _pick_tile_b(B, D_pad, act_dt.itemsize, w_bytes, cfg)
    tile_b = max(8, _round_up(int(tile_b), 8))
    B_pad = _round_up(B, tile_b)
    grid = (B_pad // tile_b,)

    est = _vmem_estimate(tile_b, D_pad, act_dt.itemsize, w_bytes)
    vmem_limit = int(min(cfg["phys"], max(cfg["budget"], est + (4 << 20))))

    # Activation prep only (weights were prepared once).
    xp = x
    if D_pad != D:
        xp = jnp.pad(xp, ((0, 0), (0, D_pad - D)))
    if B_pad != B:
        xp = jnp.pad(xp, ((0, B_pad - B), (0, 0)))
    if xp.dtype != act_dt:
        xp = xp.astype(act_dt)

    noisep = noise
    if noisep.shape[1] != 2 * HZ:
        noisep = jnp.pad(noisep, ((0, 0), (0, 2 * HZ - noisep.shape[1])))
    if B_pad != B:
        noisep = jnp.pad(noisep, ((0, B_pad - B), (0, 0)))
    noisep = noisep.astype(jnp.float32)

    def const2d(shape):
        return pl.BlockSpec(shape, lambda i: (0, 0))   # grid-invariant weight

    in_specs = [
        pl.BlockSpec((tile_b, D_pad), lambda i: (i, 0)),     # x
        pl.BlockSpec((tile_b, 2 * HZ), lambda i: (i, 0)),    # noise
        const2d((D_pad, H1)), const2d((1, H1)),              # enc1
        const2d((H1, 2 * HZ)), const2d((1, 2 * HZ)),         # enc2|enc3 fused
        const2d((H1, H1)), const2d((1, H1)),                 # dec1 (zero-extended)
        const2d((H1, D_pad)), const2d((1, D_pad)),           # dec2
    ]
    out_shapes = (
        jax.ShapeDtypeStruct((B_pad, HZ), jnp.float32),      # h
        jax.ShapeDtypeStruct((B_pad, D_pad), act_dt),        # z (lane-padded)
        jax.ShapeDtypeStruct((B_pad, 1), jnp.float32),       # per-row KL sum
    )
    out_specs = [
        pl.BlockSpec((tile_b, HZ), lambda i: (i, 0)),
        pl.BlockSpec((tile_b, D_pad), lambda i: (i, 0)),
        pl.BlockSpec((tile_b, 1), lambda i: (i, 0)),
    ]

    weight_bytes = int((2 * D_pad * H1 + 2 * H1 * H1) * w_bytes
                       + (3 * H1 + D_pad) * 4)
    cost = pl.CostEstimate(
        flops=int(2 * B_pad * (2 * D_pad * H1 + 2 * H1 * H1)),
        transcendentals=int(B_pad * (2 * HZ + D_pad)),
        bytes_accessed=int(B_pad * (2 * D_pad * act_dt.itemsize
                                    + (2 * HZ + HZ + 1) * 4) + weight_bytes),
    )

    hout, zout, klrow = pl.pallas_call(
        _vae_kernel,
        out_shape=out_shapes,
        grid_spec=pltpu.PrefetchScalarGridSpec(
            num_scalar_prefetch=0,
            grid=grid,
            in_specs=in_specs,
            out_specs=out_specs,
        ),
        compiler_params=pltpu.CompilerParams(
            dimension_semantics=("parallel",),
            vmem_limit_bytes=vmem_limit,
        ),
        cost_estimate=cost,
    )(xp, noisep,
      prep["w1"], prep["b1"], prep["wml"], prep["bml"],
      prep["wd1"], prep["bd1"], prep["wd2"], prep["bd2"])

    h = hout if B_pad == B else hout[:B]
    z = zout if (B_pad == B and D_pad == D) else zout[:B, :D]
    kl = jnp.sum(klrow if B_pad == B else klrow[:B])     # tiny (B,) reduction
    return h, z, kl


def init_params(key, dim):
    """Deterministic PyTorch-Linear-style init. Weights stored as (in, out)."""
    def linear(key, fan_in, fan_out):
        kw, kb = jax.random.split(key)
        bound = 1.0 / np.sqrt(fan_in)
        w = jax.random.uniform(kw, (fan_in, fan_out), jnp.float32, -bound, bound)
        b = jax.random.uniform(kb, (1, fan_out), jnp.float32, -bound, bound)
        return w, b

    keys = jax.random.split(key, 5)
    w1, b1 = linear(keys[0], dim, H1)     # enc1
    wmu, bmu = linear(keys[1], H1, HZ)    # enc2
    wsg, bsg = linear(keys[2], H1, HZ)    # enc3
    wd1, bd1 = linear(keys[3], HZ, H1)    # dec1
    wd2, bd2 = linear(keys[4], H1, dim)   # dec2
    return (w1, b1, wmu, bmu, wsg, bsg, wd1, bd1, wd2, bd2)


def reference_forward(x, noise, raw_params):
    """Pure-JAX reference mirroring the PyTorch module (f32)."""
    (w1, b1, wmu, bmu, wsg, bsg, wd1, bd1, wd2, bd2) = raw_params
    a1 = jax.nn.relu(x @ w1 + b1)
    mu = a1 @ wmu + bmu
    sigma = jnp.exp(a1 @ wsg + bsg)
    h = mu + sigma * noise
    kl = jnp.sum(sigma ** 2 + mu ** 2 - jnp.log(sigma) - 0.5)
    d1 = jax.nn.relu(h @ wd1 + bd1)
    z = jax.nn.sigmoid(d1 @ wd2 + bd2)
    return h, z, kl


if __name__ == "__main__":
    B, D = 16, 32  # small shapes: batch=16, dimensionality=32

    key = jax.random.PRNGKey(0)
    k_x, k_n, k_p = jax.random.split(key, 3)

    x = jax.random.normal(k_x, (B, D), jnp.float32)
    # noise stands in for self.N.sample(mu.shape); generated deterministically here
    noise = jax.random.normal(k_n, (B, HZ), jnp.float32)
    raw = init_params(k_p, D)

    # ---- f32 path: exact parity with the PyTorch-style reference ----
    prep32 = prepare_params(raw, D)                       # one-time weight prep
    h, z, kl = jax.block_until_ready(memory_vae_forward(x, noise, prep32))

    h_ref, z_ref, kl_ref = reference_forward(x, noise, raw)
    np.testing.assert_allclose(np.asarray(h), np.asarray(h_ref), rtol=1e-5, atol=1e-5)
    np.testing.assert_allclose(np.asarray(z), np.asarray(z_ref), rtol=1e-5, atol=1e-5)
    np.testing.assert_allclose(np.asarray(kl), np.asarray(kl_ref), rtol=1e-4, atol=1e-4)

    # ---- bf16 weight + activation streaming path (v6e/v7x): run + finite ----
    prep16 = prepare_params(raw, D, weights_dtype=jnp.bfloat16)
    h16, z16, kl16 = jax.block_until_ready(
        memory_vae_forward(x, noise, prep16, activations_dtype=jnp.bfloat16))
    assert h16.shape == (B, HZ) and z16.shape == (B, D)
    assert bool(np.isfinite(np.asarray(h16, dtype=np.float32)).all())
    assert bool(np.isfinite(np.asarray(z16, dtype=np.float32)).all())
    assert bool(np.isfinite(np.asarray(kl16, dtype=np.float32)).all())

    print("KERNEL_OK")
</pallas_src>

<mosaic_0001>
module attributes {stable_mosaic.version = 11 : i64} {
  func.func @_vae_kernel(%arg0: i32, %arg1: memref<16x128xf32, #tpu.memory_space<vmem>>, %arg2: memref<16x128xf32, #tpu.memory_space<vmem>>, %arg3: memref<128x128xf32, #tpu.memory_space<vmem>>, %arg4: memref<1x128xf32, #tpu.memory_space<vmem>>, %arg5: memref<128x128xf32, #tpu.memory_space<vmem>>, %arg6: memref<1x128xf32, #tpu.memory_space<vmem>>, %arg7: memref<128x128xf32, #tpu.memory_space<vmem>>, %arg8: memref<1x128xf32, #tpu.memory_space<vmem>>, %arg9: memref<128x128xf32, #tpu.memory_space<vmem>>, %arg10: memref<1x128xf32, #tpu.memory_space<vmem>>, %arg11: memref<16x64xf32, #tpu.memory_space<vmem>>, %arg12: memref<16x128xf32, #tpu.memory_space<vmem>>, %arg13: memref<16x1xf32, #tpu.memory_space<vmem>>) attributes {dimension_semantics = [#tpu.dimension_semantics<parallel>], iteration_bounds = array<i64: 1>, scalar_prefetch = 0 : i64, scratch_operands = 0 : i64, tpu.core_type = #tpu.core_type<tc>, window_params = [{transform_indices = @transform_0, window_bounds = array<i64: 16, 128>}, {transform_indices = @transform_1, window_bounds = array<i64: 16, 128>}, {pipeline_mode = #tpu.pipeline_mode<synchronous>, transform_indices = @transform_2, window_bounds = array<i64: 128, 128>}, {pipeline_mode = #tpu.pipeline_mode<synchronous>, transform_indices = @transform_3, window_bounds = array<i64: 1, 128>}, {pipeline_mode = #tpu.pipeline_mode<synchronous>, transform_indices = @transform_4, window_bounds = array<i64: 128, 128>}, {pipeline_mode = #tpu.pipeline_mode<synchronous>, transform_indices = @transform_5, window_bounds = array<i64: 1, 128>}, {pipeline_mode = #tpu.pipeline_mode<synchronous>, transform_indices = @transform_6, window_bounds = array<i64: 128, 128>}, {pipeline_mode = #tpu.pipeline_mode<synchronous>, transform_indices = @transform_7, window_bounds = array<i64: 1, 128>}, {pipeline_mode = #tpu.pipeline_mode<synchronous>, transform_indices = @transform_8, window_bounds = array<i64: 128, 128>}, {pipeline_mode = #tpu.pipeline_mode<synchronous>, transform_indices = @transform_9, window_bounds = array<i64: 1, 128>}, {transform_indices = @transform_10, window_bounds = array<i64: 16, 64>}, {transform_indices = @transform_11, window_bounds = array<i64: 16, 128>}, {transform_indices = @transform_12, window_bounds = array<i64: 16, 1>}]} {
    %c0 = arith.constant 0 : index
    %c0_0 = arith.constant 0 : index
    %0 = vector.load %arg1[%c0, %c0_0] : memref<16x128xf32, #tpu.memory_space<vmem>>, vector<16x128xf32>
    %c0_1 = arith.constant 0 : index
    %c0_2 = arith.constant 0 : index
    %1 = vector.load %arg3[%c0_1, %c0_2] : memref<128x128xf32, #tpu.memory_space<vmem>>, vector<128x128xf32>
    %cst = arith.constant dense<0.000000e+00> : vector<16x128xf32>
    %2 = tpu.matmul %0, %1, %cst {dimension_numbers = #tpu.dot_dimension_numbers<[1], [0], [0], [1], [0, 0, 1, 1], [], []>} : vector<16x128xf32>, vector<128x128xf32>, vector<16x128xf32> -> vector<16x128xf32>
    %c0_3 = arith.constant 0 : index
    %c0_4 = arith.constant 0 : index
    %3 = vector.load %arg4[%c0_3, %c0_4] : memref<1x128xf32, #tpu.memory_space<vmem>>, vector<1x128xf32>
    %4 = vector.broadcast %3 : vector<1x128xf32> to vector<16x128xf32>
    %5 = arith.addf %2, %4 : vector<16x128xf32>
    %cst_5 = arith.constant 0.000000e+00 : f32
    %6 = vector.broadcast %cst_5 : f32 to vector<16x128xf32>
    %7 = arith.maximumf %5, %6 : vector<16x128xf32>
    %c0_6 = arith.constant 0 : index
    %c0_7 = arith.constant 0 : index
    %8 = vector.load %arg5[%c0_6, %c0_7] : memref<128x128xf32, #tpu.memory_space<vmem>>, vector<128x128xf32>
    %cst_8 = arith.constant dense<0.000000e+00> : vector<16x128xf32>
    %9 = tpu.matmul %7, %8, %cst_8 {dimension_numbers = #tpu.dot_dimension_numbers<[1], [0], [0], [1], [0, 0, 1, 1], [], []>} : vector<16x128xf32>, vector<128x128xf32>, vector<16x128xf32> -> vector<16x128xf32>
    %c0_9 = arith.constant 0 : index
    %c0_10 = arith.constant 0 : index
    %10 = vector.load %arg6[%c0_9, %c0_10] : memref<1x128xf32, #tpu.memory_space<vmem>>, vector<1x128xf32>
    %11 = vector.broadcast %10 : vector<1x128xf32> to vector<16x128xf32>
    %12 = arith.addf %9, %11 : vector<16x128xf32>
    %c64_i32 = arith.constant 64 : i32
    %13 = tpu.dynamic_rotate %12 by %c64_i32 dim 1 : vector<16x128xf32>, i32 -> vector<16x128xf32>
    %14 = tpu.iota {dimensions = array<i32: 1>} : vector<16x128xi32>
    %c64_i32_11 = arith.constant 64 : i32
    %15 = vector.broadcast %c64_i32_11 : i32 to vector<16x128xi32>
    %16 = arith.cmpi slt, %14, %15 : vector<16x128xi32>
    %17 = arith.select %16, %12, %13 : vector<16x128xi1>, vector<16x128xf32>
    %18 = arith.select %16, %13, %12 : vector<16x128xi1>, vector<16x128xf32>
    %19 = math.exp %18 : vector<16x128xf32>
    %c0_12 = arith.constant 0 : index
    %c0_13 = arith.constant 0 : index
    %20 = vector.load %arg2[%c0_12, %c0_13] : memref<16x128xf32, #tpu.memory_space<vmem>>, vector<16x128xf32>
    %21 = arith.mulf %19, %20 : vector<16x128xf32>
    %22 = arith.addf %17, %21 : vector<16x128xf32>
    %23 = arith.mulf %19, %19 : vector<16x128xf32>
    %24 = arith.mulf %17, %17 : vector<16x128xf32>
    %25 = arith.addf %23, %24 : vector<16x128xf32>
    %26 = arith.subf %25, %18 : vector<16x128xf32>
    %cst_14 = arith.constant 5.000000e-01 : f32
    %27 = vector.broadcast %cst_14 : f32 to vector<16x128xf32>
    %28 = arith.subf %26, %27 : vector<16x128xf32>
    %29 = arith.select %16, %22, %28 : vector<16x128xi1>, vector<16x128xf32>
    %30 = vector.extract_strided_slice %22 {offsets = [0, 0], sizes = [16, 64], strides = [1, 1]} : vector<16x128xf32> to vector<16x64xf32>
    %c0_15 = arith.constant 0 : index
    %c0_16 = arith.constant 0 : index
    %31 = vector.load %arg11[%c0_15, %c0_16] : memref<16x64xf32, #tpu.memory_space<vmem>>, vector<16x64xf32>
    tpu.vector_store %arg11[%c0_15, %c0_16], %30 {strides = array<i32>} : memref<16x64xf32, #tpu.memory_space<vmem>>, vector<16x64xf32>,
    %cst_17 = arith.constant 0.000000e+00 : f32
    %32 = vector.broadcast %cst_17 : f32 to vector<16x128xf32>
    %33 = arith.select %16, %32, %28 : vector<16x128xi1>, vector<16x128xf32>
    %cst_18 = arith.constant dense<0.000000e+00> : vector<16xf32>
    %34 = vector.multi_reduction <add>, %33, %cst_18 [1] : vector<16x128xf32> to vector<16xf32>
    %35 = vector.shape_cast %34 : vector<16xf32> to vector<16x1xf32>
    %c0_19 = arith.constant 0 : index
    %c0_20 = arith.constant 0 : index
    %36 = vector.load %arg13[%c0_19, %c0_20] : memref<16x1xf32, #tpu.memory_space<vmem>>, vector<16x1xf32>
    tpu.vector_store %arg13[%c0_19, %c0_20], %35 {strides = array<i32>} : memref<16x1xf32, #tpu.memory_space<vmem>>, vector<16x1xf32>,
    %c0_21 = arith.constant 0 : index
    %c0_22 = arith.constant 0 : index
    %37 = vector.load %arg7[%c0_21, %c0_22] : memref<128x128xf32, #tpu.memory_space<vmem>>, vector<128x128xf32>
    %cst_23 = arith.constant dense<0.000000e+00> : vector<16x128xf32>
    %38 = tpu.matmul %29, %37, %cst_23 {dimension_numbers = #tpu.dot_dimension_numbers<[1], [0], [0], [1], [0, 0, 1, 1], [], []>} : vector<16x128xf32>, vector<128x128xf32>, vector<16x128xf32> -> vector<16x128xf32>
    %c0_24 = arith.constant 0 : index
    %c0_25 = arith.constant 0 : index
    %39 = vector.load %arg8[%c0_24, %c0_25] : memref<1x128xf32, #tpu.memory_space<vmem>>, vector<1x128xf32>
    %40 = vector.broadcast %39 : vector<1x128xf32> to vector<16x128xf32>
    %41 = arith.addf %38, %40 : vector<16x128xf32>
    %cst_26 = arith.constant 0.000000e+00 : f32
    %42 = vector.broadcast %cst_26 : f32 to vector<16x128xf32>
    %43 = arith.maximumf %41, %42 : vector<16x128xf32>
    %c0_27 = arith.constant 0 : index
    %c0_28 = arith.constant 0 : index
    %44 = vector.load %arg9[%c0_27, %c0_28] : memref<128x128xf32, #tpu.memory_space<vmem>>, vector<128x128xf32>
    %cst_29 = arith.constant dense<0.000000e+00> : vector<16x128xf32>
    %45 = tpu.matmul %43, %44, %cst_29 {dimension_numbers = #tpu.dot_dimension_numbers<[1], [0], [0], [1], [0, 0, 1, 1], [], []>} : vector<16x128xf32>, vector<128x128xf32>, vector<16x128xf32> -> vector<16x128xf32>
    %c0_30 = arith.constant 0 : index
    %c0_31 = arith.constant 0 : index
    %46 = vector.load %arg10[%c0_30, %c0_31] : memref<1x128xf32, #tpu.memory_space<vmem>>, vector<1x128xf32>
    %47 = vector.broadcast %46 : vector<1x128xf32> to vector<16x128xf32>
    %48 = arith.addf %45, %47 : vector<16x128xf32>
    %49 = arith.negf %48 : vector<16x128xf32>
    %50 = math.exp %49 : vector<16x128xf32>
    %cst_32 = arith.constant 1.000000e+00 : f32
    %51 = vector.broadcast %cst_32 : f32 to vector<16x128xf32>
    %52 = arith.addf %51, %50 : vector<16x128xf32>
    %53 = arith.divf %51, %52 : vector<16x128xf32>
    %c0_33 = arith.constant 0 : index
    %c0_34 = arith.constant 0 : index
    %54 = vector.load %arg12[%c0_33, %c0_34] : memref<16x128xf32, #tpu.memory_space<vmem>>, vector<16x128xf32>
    tpu.vector_store %arg12[%c0_33, %c0_34], %53 {strides = array<i32>} : memref<16x128xf32, #tpu.memory_space<vmem>>, vector<16x128xf32>,
    return
  }
  func.func @transform_0(%arg0: i32) -> (i32, i32) {
    %c0_i32 = arith.constant 0 : i32
    %c0_i32_0 = arith.constant 0 : i32
    return %arg0, %c0_i32 : i32, i32
  }
  func.func @transform_1(%arg0: i32) -> (i32, i32) {
    %c0_i32 = arith.constant 0 : i32
    %c0_i32_0 = arith.constant 0 : i32
    return %arg0, %c0_i32 : i32, i32
  }
  func.func @transform_2(%arg0: i32) -> (i32, i32) {
    %c0_i32 = arith.constant 0 : i32
    %c0_i32_0 = arith.constant 0 : i32
    %c0_i32_1 = arith.constant 0 : i32
    return %c0_i32, %c0_i32_0 : i32, i32
  }
  func.func @transform_3(%arg0: i32) -> (i32, i32) {
    %c0_i32 = arith.constant 0 : i32
    %c0_i32_0 = arith.constant 0 : i32
    %c0_i32_1 = arith.constant 0 : i32
    return %c0_i32, %c0_i32_0 : i32, i32
  }
  func.func @transform_4(%arg0: i32) -> (i32, i32) {
    %c0_i32 = arith.constant 0 : i32
    %c0_i32_0 = arith.constant 0 : i32
    %c0_i32_1 = arith.constant 0 : i32
    return %c0_i32, %c0_i32_0 : i32, i32
  }
  func.func @transform_5(%arg0: i32) -> (i32, i32) {
    %c0_i32 = arith.constant 0 : i32
    %c0_i32_0 = arith.constant 0 : i32
    %c0_i32_1 = arith.constant 0 : i32
    return %c0_i32, %c0_i32_0 : i32, i32
  }
  func.func @transform_6(%arg0: i32) -> (i32, i32) {
    %c0_i32 = arith.constant 0 : i32
    %c0_i32_0 = arith.constant 0 : i32
    %c0_i32_1 = arith.constant 0 : i32
    return %c0_i32, %c0_i32_0 : i32, i32
  }
  func.func @transform_7(%arg0: i32) -> (i32, i32) {
    %c0_i32 = arith.constant 0 : i32
    %c0_i32_0 = arith.constant 0 : i32
    %c0_i32_1 = arith.constant 0 : i32
    return %c0_i32, %c0_i32_0 : i32, i32
  }
  func.func @transform_8(%arg0: i32) -> (i32, i32) {
    %c0_i32 = arith.constant 0 : i32
    %c0_i32_0 = arith.constant 0 : i32
    %c0_i32_1 = arith.constant 0 : i32
    return %c0_i32, %c0_i32_0 : i32, i32
  }
  func.func @transform_9(%arg0: i32) -> (i32, i32) {
    %c0_i32 = arith.constant 0 : i32
    %c0_i32_0 = arith.constant 0 : i32
    %c0_i32_1 = arith.constant 0 : i32
    return %c0_i32, %c0_i32_0 : i32, i32
  }
  func.func @transform_10(%arg0: i32) -> (i32, i32) {
    %c0_i32 = arith.constant 0 : i32
    %c0_i32_0 = arith.constant 0 : i32
    return %arg0, %c0_i32 : i32, i32
  }
  func.func @transform_11(%arg0: i32) -> (i32, i32) {
    %c0_i32 = arith.constant 0 : i32
    %c0_i32_0 = arith.constant 0 : i32
    return %arg0, %c0_i32 : i32, i32
  }
  func.func @transform_12(%arg0: i32) -> (i32, i32) {
    %c0_i32 = arith.constant 0 : i32
    %c0_i32_0 = arith.constant 0 : i32
    return %arg0, %c0_i32 : i32, i32
  }
}

</mosaic_0001>

<llo_original>
// kernel: tpu_custom_call.1
$region0: #{tpu_custom_call.1}
  #allocation0 [shape = 'u32[]', space=smem, size = 0x4, offset = 0x4, fixed_abs, tag = 'smem constant byte address 0x4 - core index']
  #allocation1 [shape = 'u32[72,128]{1,0:T(1,128)}', space=vmem, size = 0x9000, scoped, tag = 'internal scratch']
  %s0 = inlined_call_operand.hbm [shape: f32[16,128], index: 0, kind: input, shape index: {}]
  %s1 = inlined_call_operand.hbm [shape: f32[16,128], index: 1, kind: input, shape index: {}]
  %s2 = inlined_call_operand.hbm [shape: f32[128,128], index: 2, kind: input, shape index: {}]
  %s3 = inlined_call_operand.vmem [shape: f32[1,128], index: 3, kind: input, shape index: {}]
  %s4 = inlined_call_operand.hbm [shape: f32[128,128], index: 4, kind: input, shape index: {}]
  %s5 = inlined_call_operand.vmem [shape: f32[1,128], index: 5, kind: input, shape index: {}]
  %s6 = inlined_call_operand.hbm [shape: f32[128,128], index: 6, kind: input, shape index: {}]
  %s7 = inlined_call_operand.vmem [shape: f32[1,128], index: 7, kind: input, shape index: {}]
  %s8 = inlined_call_operand.hbm [shape: f32[128,128], index: 8, kind: input, shape index: {}]
  %s9 = inlined_call_operand.vmem [shape: f32[1,128], index: 9, kind: input, shape index: {}]
  %s10 = inlined_call_operand.hbm [shape: f32[16,64], index: 10, kind: output, shape index: {0}]
  %s11 = inlined_call_operand.hbm [shape: f32[16,128], index: 11, kind: output, shape index: {1}]
  %s12 = inlined_call_operand.vmem [shape: f32[16,1], index: 12, kind: output, shape index: {2}]
  %13 = xla_tuple %s10, %s11, %s12
  %s14 = sld [smem:[#allocation0]]
  $region90: #{tpu_custom_call.1} parent=0
    _
  %s16 = ssub.s32 1, %s14
  %s17 = scalar_select 0, %s16, %s14
  $region1: #{tpu_custom_call.1} parent=0
    #allocation2 [shape = 'u8[8192]{0}', space=vmem, size = 0x2000, scoped, tag = 'input window, operand 0, single buffered']
    #allocation3 [shape = 's32[1]{0}', space=sflag, size = 0x4, scoped, tag = 'scoped memory for tpu_custom_call.1']
    #allocation4 [shape = 's32[1]{0}', space=sflag, size = 0x4, scoped, tag = 'scoped memory for tpu_custom_call.1']
    #allocation5 [shape = 'u8[8192]{0}', space=vmem, size = 0x2000, scoped, tag = 'input window, operand 1, single buffered']
    #allocation6 [shape = 's32[1]{0}', space=sflag, size = 0x4, scoped, tag = 'scoped memory for tpu_custom_call.1']
    #allocation7 [shape = 'u8[65536]{0}', space=vmem, size = 0x10000, scoped, tag = 'input window, operand 2, single buffered']
    #allocation8 [shape = 'u8[65536]{0}', space=vmem, size = 0x10000, scoped, tag = 'input window, operand 4, single buffered']
    #allocation9 [shape = 's32[1]{0}', space=sflag, size = 0x4, scoped, tag = 'scoped memory for tpu_custom_call.1']
    #allocation10 [shape = 'u8[65536]{0}', space=vmem, size = 0x10000, scoped, tag = 'input window, operand 6, single buffered']
    #allocation11 [shape = 'u8[65536]{0}', space=vmem, size = 0x10000, scoped, tag = 'input window, operand 8, single buffered']
    #allocation12 [shape = 's32[1]{0}', space=sflag, size = 0x4, scoped, tag = 'scoped memory for tpu_custom_call.1']
    #allocation13 [shape = 'u8[8192]{0}', space=vmem, size = 0x2000, scoped, tag = 'output window, operand 0, single buffered']
    #allocation14 [shape = 'u8[8192]{0}', space=vmem, size = 0x2000, scoped, tag = 'output window, operand 1, single buffered']
    #allocation15 [shape = 's32[1]{0}', space=sflag, size = 0x4, scoped, tag = 'scoped memory for tpu_custom_call.1']
    %18 = vsyncpa [#allocation3], 0
    %19 = vsyncpa [#allocation6], 0
    %20 = vsyncpa [#allocation9], 0
    %21 = vsyncpa [#allocation12], 0
    %22 = vsyncpa [#allocation4], 0
    %23 = vsyncpa [#allocation15], 0
    // Predicated region
    $region2: #{tpu_custom_call.1} parent=1 // pred_check
      _
    $region3: #{tpu_custom_call.1} parent=1 // pred_check_branch
      %25 = sbr.rel (0) target = $region5
    $region4: #{tpu_custom_call.1} parent=1 // pred_region
      %27 = vsyncadd [#allocation3], 0
      %s28 = sshll.u32 %s0, 4
      %s29 = int_to_ptr.hbm [resolvable:$true] %s28
      %s30 = sshll.u32 [#allocation2], 4
      %s31 = int_to_ptr.vmem [resolvable:$true] %s30
      %36 = dma.hbm_to_vmem [thread:$0]  %s29, 256, %s31, [#allocation3], 128, 128, 8
    $region5: #{tpu_custom_call.1} parent=1 // pred_fallthru
      _
    // Predicated region
    $region6: #{tpu_custom_call.1} parent=1 // pred_check
      _
    $region7: #{tpu_custom_call.1} parent=1 // pred_check_branch
      %38 = sbr.rel (0) target = $region9
    $region8: #{tpu_custom_call.1} parent=1 // pred_region
      %40 = vsyncadd [#allocation6], 0
      %s41 = sshll.u32 %s1, 4
      %s42 = int_to_ptr.hbm [resolvable:$true] %s41
      %s43 = sshll.u32 [#allocation5], 4
      %s44 = int_to_ptr.vmem [resolvable:$true] %s43
      %49 = dma.hbm_to_vmem [thread:$0]  %s42, 256, %s44, [#allocation6], 128, 128, 8
    $region9: #{tpu_custom_call.1} parent=1 // pred_fallthru
      _
    // Predicated region
    $region10: #{tpu_custom_call.1} parent=1 // pred_check
      _
    $region11: #{tpu_custom_call.1} parent=1 // pred_check_branch
      %51 = sbr.rel (0) target = $region13
    $region12: #{tpu_custom_call.1} parent=1 // pred_region
      %53 = vsyncadd [#allocation6], 0
      %s54 = sshll.u32 %s2, 4
      %s55 = int_to_ptr.hbm [resolvable:$true] %s54
      %s56 = sshll.u32 [#allocation7], 4
      %s57 = int_to_ptr.vmem [resolvable:$true] %s56
      %62 = dma.hbm_to_vmem [thread:$0]  %s55, 2048, %s57, [#allocation6], 128, 128, 8
    $region13: #{tpu_custom_call.1} parent=1 // pred_fallthru
      _
    // Predicated region
    $region14: #{tpu_custom_call.1} parent=1 // pred_check
      _
    $region15: #{tpu_custom_call.1} parent=1 // pred_check_branch
      %64 = sbr.rel (0) target = $region17
    $region16: #{tpu_custom_call.1} parent=1 // pred_region
      _
    $region17: #{tpu_custom_call.1} parent=1 // pred_fallthru
      _
    // Predicated region
    $region18: #{tpu_custom_call.1} parent=1 // pred_check
      _
    $region19: #{tpu_custom_call.1} parent=1 // pred_check_branch
      %66 = sbr.rel (0) target = $region21
    $region20: #{tpu_custom_call.1} parent=1 // pred_region
      %68 = vsyncadd [#allocation9], 0
      %s69 = sshll.u32 %s4, 4
      %s70 = int_to_ptr.hbm [resolvable:$true] %s69
      %s71 = sshll.u32 [#allocation8], 4
      %s72 = int_to_ptr.vmem [resolvable:$true] %s71
      %77 = dma.hbm_to_vmem [thread:$0]  %s70, 2048, %s72, [#allocation9], 128, 128, 8
    $region21: #{tpu_custom_call.1} parent=1 // pred_fallthru
      _
    // Predicated region
    $region22: #{tpu_custom_call.1} parent=1 // pred_check
      _
    $region23: #{tpu_custom_call.1} parent=1 // pred_check_branch
      %79 = sbr.rel (0) target = $region25
    $region24: #{tpu_custom_call.1} parent=1 // pred_region
      _
    $region25: #{tpu_custom_call.1} parent=1 // pred_fallthru
      _
    // Predicated region
    $region26: #{tpu_custom_call.1} parent=1 // pred_check
      _
    $region27: #{tpu_custom_call.1} parent=1 // pred_check_branch
      %81 = sbr.rel (0) target = $region29
    $region28: #{tpu_custom_call.1} parent=1 // pred_region
      %83 = vsyncadd [#allocation9], 0
      %s84 = sshll.u32 %s6, 4
      %s85 = int_to_ptr.hbm [resolvable:$true] %s84
      %s86 = sshll.u32 [#allocation10], 4
      %s87 = int_to_ptr.vmem [resolvable:$true] %s86
      %92 = dma.hbm_to_vmem [thread:$0]  %s85, 2048, %s87, [#allocation9], 128, 128, 8
    $region29: #{tpu_custom_call.1} parent=1 // pred_fallthru
      _
    // Predicated region
    $region30: #{tpu_custom_call.1} parent=1 // pred_check
      _
    $region31: #{tpu_custom_call.1} parent=1 // pred_check_branch
      %94 = sbr.rel (0) target = $region33
    $region32: #{tpu_custom_call.1} parent=1 // pred_region
      _
    $region33: #{tpu_custom_call.1} parent=1 // pred_fallthru
      _
    // Predicated region
    $region34: #{tpu_custom_call.1} parent=1 // pred_check
      _
    $region35: #{tpu_custom_call.1} parent=1 // pred_check_branch
      %96 = sbr.rel (0) target = $region37
    $region36: #{tpu_custom_call.1} parent=1 // pred_region
      %98 = vsyncadd [#allocation12], 0
      %s99 = sshll.u32 %s8, 4
      %s100 = int_to_ptr.hbm [resolvable:$true] %s99
      %s101 = sshll.u32 [#allocation11], 4
      %s102 = int_to_ptr.vmem [resolvable:$true] %s101
      %107 = dma.hbm_to_vmem [thread:$0]  %s100, 2048, %s102, [#allocation12], 128, 128, 8
    $region37: #{tpu_custom_call.1} parent=1 // pred_fallthru
      _
    // Predicated region
    $region38: #{tpu_custom_call.1} parent=1 // pred_check
      _
    $region39: #{tpu_custom_call.1} parent=1 // pred_check_branch
      %109 = sbr.rel (0) target = $region41
    $region40: #{tpu_custom_call.1} parent=1 // pred_region
      _
    $region41: #{tpu_custom_call.1} parent=1 // pred_fallthru
      _
    // Predicated region
    $region42: #{tpu_custom_call.1} parent=1 // pred_check
      _
    $region43: #{tpu_custom_call.1} parent=1 // pred_check_branch
      %111 = sbr.rel (0) target = $region45
    $region44: #{tpu_custom_call.1} parent=1 // pred_region
      %113 = dma.done [#allocation3], 256
    $region45: #{tpu_custom_call.1} parent=1 // pred_fallthru
      _
    // Predicated region
    $region46: #{tpu_custom_call.1} parent=1 // pred_check
      _
    $region47: #{tpu_custom_call.1} parent=1 // pred_check_branch
      %115 = sbr.rel (0) target = $region49
    $region48: #{tpu_custom_call.1} parent=1 // pred_region
      %117 = dma.done [#allocation6], 256
    $region49: #{tpu_custom_call.1} parent=1 // pred_fallthru
      _
    // Predicated region
    $region50: #{tpu_custom_call.1} parent=1 // pred_check
      _
    $region51: #{tpu_custom_call.1} parent=1 // pred_check_branch
      %119 = sbr.rel (0) target = $region53
    $region52: #{tpu_custom_call.1} parent=1 // pred_region
      %121 = dma.done [#allocation6], 2048
    $region53: #{tpu_custom_call.1} parent=1 // pred_fallthru
      _
    // Predicated region
    $region54: #{tpu_custom_call.1} parent=1 // pred_check
      _
    $region55: #{tpu_custom_call.1} parent=1 // pred_check_branch
      %123 = sbr.rel (0) target = $region57
    $region56: #{tpu_custom_call.1} parent=1 // pred_region
      %125 = dma.done [#allocation9], 2048
    $region57: #{tpu_custom_call.1} parent=1 // pred_fallthru
      _
    // Predicated region
    $region58: #{tpu_custom_call.1} parent=1 // pred_check
      _
    $region59: #{tpu_custom_call.1} parent=1 // pred_check_branch
      %127 = sbr.rel (0) target = $region61
    $region60: #{tpu_custom_call.1} parent=1 // pred_region
      %129 = dma.done [#allocation9], 2048
    $region61: #{tpu_custom_call.1} parent=1 // pred_fallthru
      _
    // Predicated region
    $region62: #{tpu_custom_call.1} parent=1 // pred_check
      _
    $region63: #{tpu_custom_call.1} parent=1 // pred_check_branch
      %131 = sbr.rel (0) target = $region65
    $region64: #{tpu_custom_call.1} parent=1 // pred_region
      %133 = dma.done [#allocation12], 2048
    $region65: #{tpu_custom_call.1} parent=1 // pred_fallthru
      _
    %v134 = vld [vmem:[#allocation2] sm:$0xff]
    %v135 = vld [vmem:[#allocation2 + $0x8] sm:$0xff]
    %v136 = vld [vmem:[#allocation7] sm:$0xff]
    %v137 = vld [vmem:[#allocation7 + $0x8] sm:$0xff]
    %v138 = vld [vmem:[#allocation7 + $0x10] sm:$0xff]
    %v139 = vld [vmem:[#allocation7 + $0x18] sm:$0xff]
    %v140 = vld [vmem:[#allocation7 + $0x20] sm:$0xff]
    %v141 = vld [vmem:[#allocation7 + $0x28] sm:$0xff]
    %v142 = vld [vmem:[#allocation7 + $0x30] sm:$0xff]
    %v143 = vld [vmem:[#allocation7 + $0x38] sm:$0xff]
    %v144 = vld [vmem:[#allocation7 + $0x40] sm:$0xff]
    %v145 = vld [vmem:[#allocation7 + $0x48] sm:$0xff]
    %v146 = vld [vmem:[#allocation7 + $0x50] sm:$0xff]
    %v147 = vld [vmem:[#allocation7 + $0x58] sm:$0xff]
    %v148 = vld [vmem:[#allocation7 + $0x60] sm:$0xff]
    %v149 = vld [vmem:[#allocation7 + $0x68] sm:$0xff]
    %v150 = vld [vmem:[#allocation7 + $0x70] sm:$0xff]
    %v151 = vld [vmem:[#allocation7 + $0x78] sm:$0xff]
    %v152 = vld [vmem:[%s3] sm:$0x1]
    %v154 = vperm.slane %v152, 0
    %156 = vmatpush.msra.mxu0 %v151
    %157 = vmatpush.msra.mxu0 %v150
    %158 = vmatpush.msra.mxu0 %v149
    %159 = vmatpush.msra.mxu0 %v148
    %160 = vmatpush.msra.mxu0 %v147
    %161 = vmatpush.msra.mxu0 %v146
    %162 = vmatpush.msra.mxu0 %v145
    %163 = vmatpush.msra.mxu0 %v144
    %164 = vmatpush.msra.mxu0 %v143
    %165 = vmatpush.msra.mxu0 %v142
    %166 = vmatpush.msra.mxu0 %v141
    %167 = vmatpush.msra.mxu0 %v140
    %168 = vmatpush.msra.mxu0 %v139
    %169 = vmatpush.msra.mxu0 %v138
    %170 = vmatpush.msra.mxu0 %v137
    %171 = vmatpush.msra.mxu0 %v136
    %172 = vmatmul.f32.gmra.mxu0 %v134
    %v173 = vpop.f32.mrf.mxu0
    %v174 = vadd.f32 %v154, %v173
    %175 = vmatmul.f32.gmra.mxu0 %v135
    %v176 = vpop.f32.mrf.mxu0
    %v177 = vadd.f32 %v154, %v176
    %178 = vdwg.mxu0
    %v179 = vmax.f32 %v174, 0.0
    %v180 = vmax.f32 %v177, 0.0
    %v181 = vld [vmem:[#allocation8] sm:$0xff]
    %v182 = vld [vmem:[#allocation8 + $0x8] sm:$0xff]
    %v183 = vld [vmem:[#allocation8 + $0x10] sm:$0xff]
    %v184 = vld [vmem:[#allocation8 + $0x18] sm:$0xff]
    %v185 = vld [vmem:[#allocation8 + $0x20] sm:$0xff]
    %v186 = vld [vmem:[#allocation8 + $0x28] sm:$0xff]
    %v187 = vld [vmem:[#allocation8 + $0x30] sm:$0xff]
    %v188 = vld [vmem:[#allocation8 + $0x38] sm:$0xff]
    %v189 = vld [vmem:[#allocation8 + $0x40] sm:$0xff]
    %v190 = vld [vmem:[#allocation8 + $0x48] sm:$0xff]
    %v191 = vld [vmem:[#allocation8 + $0x50] sm:$0xff]
    %v192 = vld [vmem:[#allocation8 + $0x58] sm:$0xff]
    %v193 = vld [vmem:[#allocation8 + $0x60] sm:$0xff]
    %v194 = vld [vmem:[#allocation8 + $0x68] sm:$0xff]
    %v195 = vld [vmem:[#allocation8 + $0x70] sm:$0xff]
    %v196 = vld [vmem:[#allocation8 + $0x78] sm:$0xff]
    %v197 = vld [vmem:[%s5] sm:$0x1]
    %v199 = vperm.slane %v197, 0
    %201 = vmatpush.msra.mxu0 %v196
    %202 = vmatpush.msra.mxu0 %v195
    %203 = vmatpush.msra.mxu0 %v194
    %204 = vmatpush.msra.mxu0 %v193
    %205 = vmatpush.msra.mxu0 %v192
    %206 = vmatpush.msra.mxu0 %v191
    %207 = vmatpush.msra.mxu0 %v190
    %208 = vmatpush.msra.mxu0 %v189
    %209 = vmatpush.msra.mxu0 %v188
    %210 = vmatpush.msra.mxu0 %v187
    %211 = vmatpush.msra.mxu0 %v186
    %212 = vmatpush.msra.mxu0 %v185
    %213 = vmatpush.msra.mxu0 %v184
    %214 = vmatpush.msra.mxu0 %v183
    %215 = vmatpush.msra.mxu0 %v182
    %216 = vmatpush.msra.mxu0 %v181
    %217 = vmatmul.f32.gmra.mxu0 %v179
    %v218 = vpop.f32.mrf.mxu0
    %v219 = vadd.f32 %v199, %v218
    %220 = vmatmul.f32.gmra.mxu0 %v180
    %v221 = vpop.f32.mrf.mxu0
    %v222 = vadd.f32 %v199, %v221
    %223 = vdwg.mxu0
    %224 = vrot.lane.b32.xlu0 %v219, 64
    %v225 = vpop.permute.xlu0 %224
    %226 = vrot.lane.b32.xlu0 %v222, 64
    %v227 = vpop.permute.xlu0 %226
    %v228 = vlaneseq
    %v229 = vand.u32 %v228, 127
    %vm230 = vcmp.lt.s32.totalorder %v229, 64
    %v231 = vsel %vm230, %v219, %v225
    %v232 = vsel %vm230, %v222, %v227
    %v233 = vsel %vm230, %v225, %v219
    %v234 = vsel %vm230, %v227, %v222
    %v235 = vmul.f32 %v233, 1.442695
    %v236 = vpow.pop %v235
    %v237 = vmul.f32 %v234, 1.442695
    %v238 = vpow.pop %v237
    %v239 = vld [vmem:[#allocation5] sm:$0xff]
    %v240 = vld [vmem:[#allocation5 + $0x8] sm:$0xff]
    %v241 = vmul.f32 %v236, %v239
    %v242 = vmul.f32 %v238, %v240
    %v243 = vadd.f32 %v231, %v241
    %v244 = vadd.f32 %v232, %v242
    %v245 = vmul.f32 %v236, %v236
    %v246 = vmul.f32 %v238, %v238
    %v247 = vmul.f32 %v231, %v231
    %v248 = vmul.f32 %v232, %v232
    %v249 = vadd.f32 %v245, %v247
    %v250 = vadd.f32 %v246, %v248
    %v251 = vsub.f32 %v249, %v233
    %v252 = vsub.f32 %v250, %v234
    %v253 = vsub.f32 %v251, 0.5
    %v254 = vsub.f32 %v252, 0.5
    %v255 = vsel %vm230, %v243, %v253
    %v256 = vsel %vm230, %v244, %v254
    %vm257 = vcmask 523264
    %258 = vst.msk [vmem:[#allocation13] sm:$0xff] %vm257, %v243
    %259 = vst.msk [vmem:[#allocation13 + $0x8] sm:$0xff] %vm257, %v244
    %v260 = vsel %vm230, 0.0, %v253
    %v261 = vsel %vm230, 0.0, %v254
    %262 = vadd.xlane.f32.xlu0 %v260
    %v263 = vpop.xlane.xlu0 %262
    %264 = vadd.xlane.f32.xlu0 %v261
    %v265 = vpop.xlane.xlu0 %264
    %vm266 = vcmask 7168
    %267 = vst.msk [vmem:[%s12] sm:$0xff] %vm266, %v263
    %268 = vst.msk [vmem:[%s12 + $0x8] sm:$0xff] %vm266, %v265
    %v269 = vld [vmem:[#allocation10] sm:$0xff]
    %v270 = vld [vmem:[#allocation10 + $0x8] sm:$0xff]
    %v271 = vld [vmem:[#allocation10 + $0x10] sm:$0xff]
    %v272 = vld [vmem:[#allocation10 + $0x18] sm:$0xff]
    %v273 = vld [vmem:[#allocation10 + $0x20] sm:$0xff]
    %v274 = vld [vmem:[#allocation10 + $0x28] sm:$0xff]
    %v275 = vld [vmem:[#allocation10 + $0x30] sm:$0xff]
    %v276 = vld [vmem:[#allocation10 + $0x38] sm:$0xff]
    %v277 = vld [vmem:[#allocation10 + $0x40] sm:$0xff]
    %v278 = vld [vmem:[#allocation10 + $0x48] sm:$0xff]
    %v279 = vld [vmem:[#allocation10 + $0x50] sm:$0xff]
    %v280 = vld [vmem:[#allocation10 + $0x58] sm:$0xff]
    %v281 = vld [vmem:[#allocation10 + $0x60] sm:$0xff]
    %v282 = vld [vmem:[#allocation10 + $0x68] sm:$0xff]
    %v283 = vld [vmem:[#allocation10 + $0x70] sm:$0xff]
    %v284 = vld [vmem:[#allocation10 + $0x78] sm:$0xff]
    %v285 = vld [vmem:[%s7] sm:$0x1]
    %v287 = vperm.slane %v285, 0
    %289 = vmatpush.msra.mxu0 %v284
    %290 = vmatpush.msra.mxu0 %v283
    %291 = vmatpush.msra.mxu0 %v282
    %292 = vmatpush.msra.mxu0 %v281
    %293 = vmatpush.msra.mxu0 %v280
    %294 = vmatpush.msra.mxu0 %v279
    %295 = vmatpush.msra.mxu0 %v278
    %296 = vmatpush.msra.mxu0 %v277
    %297 = vmatpush.msra.mxu0 %v276
    %298 = vmatpush.msra.mxu0 %v275
    %299 = vmatpush.msra.mxu0 %v274
    %300 = vmatpush.msra.mxu0 %v273
    %301 = vmatpush.msra.mxu0 %v272
    %302 = vmatpush.msra.mxu0 %v271
    %303 = vmatpush.msra.mxu0 %v270
    %304 = vmatpush.msra.mxu0 %v269
    %305 = vmatmul.f32.gmra.mxu0 %v255
    %v306 = vpop.f32.mrf.mxu0
    %v307 = vadd.f32 %v287, %v306
    %308 = vmatmul.f32.gmra.mxu0 %v256
    %v309 = vpop.f32.mrf.mxu0
    %v310 = vadd.f32 %v287, %v309
    %311 = vdwg.mxu0
    %v312 = vmax.f32 %v307, 0.0
    %v313 = vmax.f32 %v310, 0.0
    %v314 = vld [vmem:[#allocation11] sm:$0xff]
    %v315 = vld [vmem:[#allocation11 + $0x8] sm:$0xff]
    %v316 = vld [vmem:[#allocation11 + $0x10] sm:$0xff]
    %v317 = vld [vmem:[#allocation11 + $0x18] sm:$0xff]
    %v318 = vld [vmem:[#allocation11 + $0x20] sm:$0xff]
    %v319 = vld [vmem:[#allocation11 + $0x28] sm:$0xff]
    %v320 = vld [vmem:[#allocation11 + $0x30] sm:$0xff]
    %v321 = vld [vmem:[#allocation11 + $0x38] sm:$0xff]
    %v322 = vld [vmem:[#allocation11 + $0x40] sm:$0xff]
    %v323 = vld [vmem:[#allocation11 + $0x48] sm:$0xff]
    %v324 = vld [vmem:[#allocation11 + $0x50] sm:$0xff]
    %v325 = vld [vmem:[#allocation11 + $0x58] sm:$0xff]
    %v326 = vld [vmem:[#allocation11 + $0x60] sm:$0xff]
    %v327 = vld [vmem:[#allocation11 + $0x68] sm:$0xff]
    %v328 = vld [vmem:[#allocation11 + $0x70] sm:$0xff]
    %v329 = vld [vmem:[#allocation11 + $0x78] sm:$0xff]
    %v330 = vld [vmem:[%s9] sm:$0x1]
    %v332 = vperm.slane %v330, 0
    %334 = vmatpush.msra.mxu0 %v329
    %335 = vmatpush.msra.mxu0 %v328
    %336 = vmatpush.msra.mxu0 %v327
    %337 = vmatpush.msra.mxu0 %v326
    %338 = vmatpush.msra.mxu0 %v325
    %339 = vmatpush.msra.mxu0 %v324
    %340 = vmatpush.msra.mxu0 %v323
    %341 = vmatpush.msra.mxu0 %v322
    %342 = vmatpush.msra.mxu0 %v321
    %343 = vmatpush.msra.mxu0 %v320
    %344 = vmatpush.msra.mxu0 %v319
    %345 = vmatpush.msra.mxu0 %v318
    %346 = vmatpush.msra.mxu0 %v317
    %347 = vmatpush.msra.mxu0 %v316
    %348 = vmatpush.msra.mxu0 %v315
    %349 = vmatpush.msra.mxu0 %v314
    %350 = vmatmul.f32.gmra.mxu0 %v312
    %v351 = vpop.f32.mrf.mxu0
    %v352 = vadd.f32 %v332, %v351
    %353 = vmatmul.f32.gmra.mxu0 %v313
    %v354 = vpop.f32.mrf.mxu0
    %v355 = vadd.f32 %v332, %v354
    %356 = vdwg.mxu0
    %v357 = vxor.u32 %v352, 2147483648
    %v358 = vxor.u32 %v355, 2147483648
    %v359 = vmul.f32 %v357, 1.442695
    %v360 = vpow.pop %v359
    %v361 = vmul.f32 %v358, 1.442695
    %v362 = vpow.pop %v361
    %v363 = vadd.f32 %v360, 1.0
    %v364 = vadd.f32 %v362, 1.0
    %v365 = vrcp.pop %v363
    %v366 = vmul.f32 %v363, %v365
    %v367 = vsub.f32 1.0, %v366
    %v368 = vmul.f32 %v365, %v367
    %v369 = vadd.f32 %v365, %v368
    %vm370 = vweird.f32 %v363
    %vm371 = vweird.f32 %v365
    %vm372 = vmor %vm370, %vm371
    %v373 = vsel %vm372, %v365, %v369
    %v374 = vand.u32 2147483647, %v363
    %vm375 = vcmp.eq.f32.partialorder %v374, 8.507059e+37
    %v376 = vand.u32 %v363, 2147483648
    %v377 = vor.u32 1.1754944e-38, %v376
    %v378 = vsel %vm375, %v377, %v373
    %v379 = vmul.f32 1.0, %v378
    %v380 = vrcp.pop %v364
    %v381 = vmul.f32 %v364, %v380
    %v382 = vsub.f32 1.0, %v381
    %v383 = vmul.f32 %v380, %v382
    %v384 = vadd.f32 %v380, %v383
    %vm385 = vweird.f32 %v364
    %vm386 = vweird.f32 %v380
    %vm387 = vmor %vm385, %vm386
    %v388 = vsel %vm387, %v380, %v384
    %v389 = vand.u32 2147483647, %v364
    %vm390 = vcmp.eq.f32.partialorder %v389, 8.507059e+37
    %v391 = vand.u32 %v364, 2147483648
    %v392 = vor.u32 1.1754944e-38, %v391
    %v393 = vsel %vm390, %v392, %v388
    %v394 = vmul.f32 1.0, %v393
    %395 = vst [vmem:[#allocation14] sm:$0xff] %v379
    %396 = vst [vmem:[#allocation14 + $0x8] sm:$0xff] %v394
    // Predicated region
    $region66: #{tpu_custom_call.1} parent=1 // pred_check
      _
    $region67: #{tpu_custom_call.1} parent=1 // pred_check_branch
      %398 = sbr.rel (0) target = $region69
    $region68: #{tpu_custom_call.1} parent=1 // pred_region
      %400 = vsyncadd [#allocation4], 0
      %s401 = sshll.u32 [#allocation13], 4
      %s402 = int_to_ptr.vmem [resolvable:$true] %s401
      %s403 = sshll.u32 %s10, 4
      %s404 = int_to_ptr.hbm [resolvable:$true] %s403
      %409 = dma.vmem_to_hbm [thread:$0]  %s402, 256, %s404, [#allocation4], 128, 128, 8
    $region69: #{tpu_custom_call.1} parent=1 // pred_fallthru
      _
    // Predicated region
    $region70: #{tpu_custom_call.1} parent=1 // pred_check
      _
    $region71: #{tpu_custom_call.1} parent=1 // pred_check_branch
      %411 = sbr.rel (0) target = $region73
    $region72: #{tpu_custom_call.1} parent=1 // pred_region
      %413 = vsyncadd [#allocation15], 0
      %s414 = sshll.u32 [#allocation14], 4
      %s415 = int_to_ptr.vmem [resolvable:$true] %s414
      %s416 = sshll.u32 %s11, 4
      %s417 = int_to_ptr.hbm [resolvable:$true] %s416
      %422 = dma.vmem_to_hbm [thread:$0]  %s415, 256, %s417, [#allocation15], 128, 128, 8
    $region73: #{tpu_custom_call.1} parent=1 // pred_fallthru
      _
    // Predicated region
    $region74: #{tpu_custom_call.1} parent=1 // pred_check
      _
    $region75: #{tpu_custom_call.1} parent=1 // pred_check_branch
      %424 = sbr.rel (0) target = $region77
    $region76: #{tpu_custom_call.1} parent=1 // pred_region
      _
    $region77: #{tpu_custom_call.1} parent=1 // pred_fallthru
      _
    // Predicated region
    $region78: #{tpu_custom_call.1} parent=1 // pred_check
      _
    $region79: #{tpu_custom_call.1} parent=1 // pred_check_branch
      %426 = sbr.rel (0) target = $region81
    $region80: #{tpu_custom_call.1} parent=1 // pred_region
      %428 = dma.done [#allocation4], 256
    $region81: #{tpu_custom_call.1} parent=1 // pred_fallthru
      _
    // Predicated region
    $region82: #{tpu_custom_call.1} parent=1 // pred_check
      _
    $region83: #{tpu_custom_call.1} parent=1 // pred_check_branch
      %430 = sbr.rel (0) target = $region85
    $region84: #{tpu_custom_call.1} parent=1 // pred_region
      %432 = dma.done [#allocation15], 256
    $region85: #{tpu_custom_call.1} parent=1 // pred_fallthru
      _
    // Predicated region
    $region86: #{tpu_custom_call.1} parent=1 // pred_check
      _
    $region87: #{tpu_custom_call.1} parent=1 // pred_check_branch
      %434 = sbr.rel (0) target = $region89
    $region88: #{tpu_custom_call.1} parent=1 // pred_region
      _
    $region89: #{tpu_custom_call.1} parent=1 // pred_fallthru
      _
    %435 = vsyncpa [#allocation3], 1
    %436 = vsyncpa [#allocation6], 1
    %437 = vsyncpa [#allocation9], 1
    %438 = vsyncpa [#allocation12], 1
    %439 = vsyncpa [#allocation4], 1
    %440 = vsyncpa [#allocation15], 1

</llo_original>
